<compile_context>
chip_gen: v6e
topology: v6e:2x2x1
jax: 0.10.0
libtpu: 0.0.40
codegen_flags: <defaults>
</compile_context>

<pallas_src>
import jax
import jax.numpy as jnp
from jax.experimental import pallas as pl
from jax.experimental.pallas import tpu as pltpu


# ----------------------------- Pallas kernel --------------------------------
def _synthesis_kernel(style_ref,    # (B, S)        styles
                      x_ref,        # (Cin, B*HW)   en_feats, batch folded into lanes
                      noise_ref,    # (1, HW)       fixed per-pixel noise (lane-dense)
                      wa_ref,       # (Cin, S)      style affine weight
                      ba_ref,       # (Cin, 1)      style affine bias (column)
                      w_ref,        # (Cout, Cin)   1x1 conv weight
                      wsq_ref,      # (Cout, Cin)   precomputed w*w (fixed param)
                      nstr_ref,     # (1, 1)        noise strength (SMEM scalar)
                      wrgb_ref,     # (3, Cout)     toRGB weight
                      brgb_ref,     # (3, 1)        toRGB bias (column)
                      img_ref):     # (3, B*HW)     output image, batch folded into lanes
    batch = style_ref.shape[0]
    cin = wa_ref.shape[0]
    cout = w_ref.shape[0]
    hw = noise_ref.shape[1]

    wa = wa_ref[...]                                              # (Cin, S)
    ba = ba_ref[...]                                              # (Cin, 1)

    # --- style affine on VPU + XLU lane-reduce (keeps it off the MXU critical
    # path so the mod-conv matmul can start as soon as x is modulated).
    # s_b[ci] = sum_s wa[ci,s] * style[b,s] + ba[ci] + 1
    s_cols = []
    for b in range(batch):                                        # B tiny, static
        row = style_ref[b:b + 1, :]                               # (1, S)
        s_b = jnp.sum(wa * row, axis=-1, keepdims=True) + ba + 1.0  # (Cin, 1)
        s_cols.append(s_b)
    s_t = jnp.concatenate(s_cols, axis=-1)                        # (Cin, B)

    # Modulation scale broadcast across the folded (batch*HW) lane axis.
    scale = jnp.concatenate(
        [jnp.broadcast_to(s_cols[b], (cin, hw)) for b in range(batch)],
        axis=-1)                                                  # (Cin, B*HW)

    # --- demodulation factors for all samples at once (one tiny MXU dot;
    # independent of the conv matmul below, so the two can overlap):
    # demod[co,b] = rsqrt(sum_ci w[co,ci]^2 * s[ci,b]^2 + eps)
    demod_t = jax.lax.rsqrt(
        jnp.dot(wsq_ref[...], s_t * s_t,
                preferred_element_type=jnp.float32) + 1e-8)       # (Cout, B)
    demod_scale = jnp.concatenate(
        [jnp.broadcast_to(demod_t[:, b:b + 1], (cout, hw)) for b in range(batch)],
        axis=-1)                                                  # (Cout, B*HW)

    # --- fused modulated conv: ONE MXU matmul covering the whole batch ------
    x_mod = x_ref[...] * scale                                    # (Cin, B*HW)
    y = jnp.dot(w_ref[...], x_mod,
                preferred_element_type=jnp.float32)               # (Cout, B*HW)
    y = y * demod_scale

    # --- fixed-noise injection (scale hoisted) + LeakyReLU(0.2) -------------
    scaled_noise = nstr_ref[0, 0] * noise_ref[...]                # (1, HW)
    noise_full = jnp.concatenate([scaled_noise] * batch, axis=-1) # (1, B*HW)
    y = y + noise_full                                            # bcast over Cout
    y = jnp.maximum(y, 0.2 * y)

    # --- toRGB: ONE matmul, 128-lane-dense unmasked store --------------------
    img = jnp.dot(wrgb_ref[...], y,
                  preferred_element_type=jnp.float32) + brgb_ref[...]  # (3, B*HW)
    img_ref[...] = img.astype(img_ref.dtype)


# ------------------------- Synthesis network (JAX glue) ---------------------
class SynthesisNetwork:
    """Minimal StyleGAN2-style synthesis block with deterministic params."""

    def __init__(self, style_dim, cin, cout, height, width, seed=1234):
        self.style_dim = style_dim
        self.cin, self.cout = cin, cout
        self.height, self.width = height, width
        k = jax.random.PRNGKey(seed)
        k1, k2, k3, knoise = jax.random.split(k, 4)
        # Weights stored so every in-kernel contraction is layout-native.
        self.wa = jax.random.normal(k1, (cin, style_dim), jnp.float32) * 0.1
        self.ba = jnp.zeros((cin, 1), jnp.float32)
        self.w = jax.random.normal(k2, (cout, cin), jnp.float32) * 0.1
        self.w_sq = self.w * self.w                       # fixed param, precomputed
        self.noise_strength = jnp.full((1, 1), 0.05, jnp.float32)
        self.wrgb = jax.random.normal(k3, (3, cout), jnp.float32) * 0.1
        self.brgb = jnp.zeros((3, 1), jnp.float32)
        # Deterministic noise generated when the caller does not supply one
        # (this is the value Wrapper captures at construction time).
        self._default_noise = jax.random.normal(
            knoise, (1, height * width), jnp.float32)
        # One compiled executable for the full forward path (layout ops + kernel).
        self._jit_forward = jax.jit(self._forward_impl)

    def _forward_impl(self, style, en_feats, noise):
        b = style.shape[0]
        hw = self.height * self.width

        # NCHW -> (Cin, B*HW): fold the batch into the lane axis.
        x_flat = jnp.transpose(
            en_feats.reshape(b, self.cin, hw), (1, 0, 2)).reshape(self.cin, b * hw)

        def vmem():
            return pl.BlockSpec(memory_space=pltpu.MemorySpace.VMEM)

        def smem():
            return pl.BlockSpec(memory_space=pltpu.MemorySpace.SMEM)

        img_flat = pl.pallas_call(
            _synthesis_kernel,
            out_shape=jax.ShapeDtypeStruct((3, b * hw), jnp.float32),
            in_specs=[vmem(),   # style
                      vmem(),   # x_flat
                      vmem(),   # noise
                      vmem(),   # wa
                      vmem(),   # ba
                      vmem(),   # w
                      vmem(),   # w_sq
                      smem(),   # noise_strength (scalar)
                      vmem(),   # wrgb
                      vmem()],  # brgb
            out_specs=vmem(),
        )(style, x_flat, noise, self.wa, self.ba, self.w, self.w_sq,
          self.noise_strength, self.wrgb, self.brgb)

        # (3, B*HW) -> NCHW (B, 3, H, W).
        img = jnp.transpose(
            img_flat.reshape(3, b, self.height, self.width), (1, 0, 2, 3))
        return img

    def __call__(self, style, en_feats, noise=None):
        # style:    (B, style_dim)   float32
        # en_feats: (B, Cin, H, W)   float32 (NCHW, PyTorch convention)
        if noise is None:
            noise = self._default_noise
        img = self._jit_forward(style, en_feats, noise)
        return {"img": img, "noise": noise}


# -------------------------------- Wrapper ------------------------------------
class Wrapper:
    """Mirror of the PyTorch Wrapper: freeze the noise from a template call."""

    def __init__(self, synthesis_network, style_tmp, en_feats_tmp):
        self.m = synthesis_network
        self.noise = self.m(style_tmp, en_feats_tmp)["noise"]

    def __call__(self, style, en_feats):
        return self.m(style, en_feats, noise=self.noise)["img"]


# --------------------------------- main --------------------------------------
if __name__ == "__main__":
    B, STYLE_DIM, CIN, COUT, H, W = 2, 32, 16, 16, 8, 8

    net = SynthesisNetwork(STYLE_DIM, CIN, COUT, H, W, seed=1234)

    key = jax.random.PRNGKey(0)
    k_st, k_ef, k_st2, k_ef2 = jax.random.split(key, 4)
    style_tmp = jax.random.normal(k_st, (B, STYLE_DIM), jnp.float32)
    en_feats_tmp = jax.random.normal(k_ef, (B, CIN, H, W), jnp.float32)

    wrapper = Wrapper(net, style_tmp, en_feats_tmp)

    style = jax.random.normal(k_st2, (B, STYLE_DIM), jnp.float32)
    en_feats = jax.random.normal(k_ef2, (B, CIN, H, W), jnp.float32)

    img = wrapper(style, en_feats)
    jax.block_until_ready(img)
    assert img.shape == (B, 3, H, W)
    assert bool(jnp.all(jnp.isfinite(img)))
    print("KERNEL_OK")
</pallas_src>

<mosaic_0001>
module attributes {stable_mosaic.version = 11 : i64} {
  func.func @_synthesis_kernel(%arg0: memref<2x32xf32, #tpu.memory_space<vmem>>, %arg1: memref<16x128xf32, #tpu.memory_space<vmem>>, %arg2: memref<1x64xf32, #tpu.memory_space<vmem>>, %arg3: memref<16x32xf32, #tpu.memory_space<vmem>>, %arg4: memref<16x1xf32, #tpu.memory_space<vmem>>, %arg5: memref<16x16xf32, #tpu.memory_space<vmem>>, %arg6: memref<16x16xf32, #tpu.memory_space<vmem>>, %arg7: memref<1x1xf32, #tpu.memory_space<smem>>, %arg8: memref<3x16xf32, #tpu.memory_space<vmem>>, %arg9: memref<3x1xf32, #tpu.memory_space<vmem>>, %arg10: memref<3x128xf32, #tpu.memory_space<vmem>>) attributes {dimension_semantics = [], scalar_prefetch = 0 : i64, scratch_operands = 0 : i64, tpu.core_type = #tpu.core_type<tc>} {
    %c0 = arith.constant 0 : index
    %c0_0 = arith.constant 0 : index
    %0 = vector.load %arg3[%c0, %c0_0] : memref<16x32xf32, #tpu.memory_space<vmem>>, vector<16x32xf32>
    %c0_1 = arith.constant 0 : index
    %c0_2 = arith.constant 0 : index
    %1 = vector.load %arg4[%c0_1, %c0_2] : memref<16x1xf32, #tpu.memory_space<vmem>>, vector<16x1xf32>
    %c0_3 = arith.constant 0 : index
    %c0_4 = arith.constant 0 : index
    %2 = vector.load %arg0[%c0_3, %c0_4] : memref<2x32xf32, #tpu.memory_space<vmem>>, vector<1x32xf32>
    %3 = vector.broadcast %2 : vector<1x32xf32> to vector<16x32xf32>
    %4 = arith.mulf %0, %3 : vector<16x32xf32>
    %cst = arith.constant dense<0.000000e+00> : vector<16xf32>
    %5 = vector.multi_reduction <add>, %4, %cst [1] : vector<16x32xf32> to vector<16xf32>
    %6 = vector.shape_cast %5 : vector<16xf32> to vector<16x1xf32>
    %7 = arith.addf %6, %1 : vector<16x1xf32>
    %cst_5 = arith.constant 1.000000e+00 : f32
    %8 = vector.broadcast %cst_5 : f32 to vector<16x1xf32>
    %9 = arith.addf %7, %8 : vector<16x1xf32>
    %c1 = arith.constant 1 : index
    %c0_6 = arith.constant 0 : index
    %10 = vector.load %arg0[%c1, %c0_6] : memref<2x32xf32, #tpu.memory_space<vmem>>, vector<1x32xf32>
    %11 = vector.broadcast %10 : vector<1x32xf32> to vector<16x32xf32>
    %12 = arith.mulf %0, %11 : vector<16x32xf32>
    %cst_7 = arith.constant dense<0.000000e+00> : vector<16xf32>
    %13 = vector.multi_reduction <add>, %12, %cst_7 [1] : vector<16x32xf32> to vector<16xf32>
    %14 = vector.shape_cast %13 : vector<16xf32> to vector<16x1xf32>
    %15 = arith.addf %14, %1 : vector<16x1xf32>
    %cst_8 = arith.constant 1.000000e+00 : f32
    %16 = vector.broadcast %cst_8 : f32 to vector<16x1xf32>
    %17 = arith.addf %15, %16 : vector<16x1xf32>
    %18 = tpu.concatenate %9, %17 in 1 : vector<16x1xf32>, vector<16x1xf32> -> vector<16x2xf32>
    %19 = vector.shape_cast %9 : vector<16x1xf32> to vector<16x1xf32>
    %20 = vector.broadcast %19 : vector<16x1xf32> to vector<16x64xf32>
    %21 = vector.shape_cast %17 : vector<16x1xf32> to vector<16x1xf32>
    %22 = vector.broadcast %21 : vector<16x1xf32> to vector<16x64xf32>
    %23 = tpu.concatenate %20, %22 in 1 : vector<16x64xf32>, vector<16x64xf32> -> vector<16x128xf32>
    %c0_9 = arith.constant 0 : index
    %c0_10 = arith.constant 0 : index
    %24 = vector.load %arg6[%c0_9, %c0_10] : memref<16x16xf32, #tpu.memory_space<vmem>>, vector<16x16xf32>
    %25 = arith.mulf %18, %18 : vector<16x2xf32>
    %cst_11 = arith.constant dense<0.000000e+00> : vector<16x2xf32>
    %26 = tpu.matmul %24, %25, %cst_11 {dimension_numbers = #tpu.dot_dimension_numbers<[1], [0], [0], [1], [0, 0, 1, 1], [], []>} : vector<16x16xf32>, vector<16x2xf32>, vector<16x2xf32> -> vector<16x2xf32>
    %cst_12 = arith.constant 9.99999993E-9 : f32
    %27 = vector.broadcast %cst_12 : f32 to vector<16x2xf32>
    %28 = arith.addf %26, %27 : vector<16x2xf32>
    %29 = math.rsqrt %28 : vector<16x2xf32>
    %30 = vector.extract_strided_slice %29 {offsets = [0, 0], sizes = [16, 1], strides = [1, 1]} : vector<16x2xf32> to vector<16x1xf32>
    %31 = vector.shape_cast %30 : vector<16x1xf32> to vector<16x1xf32>
    %32 = vector.broadcast %31 : vector<16x1xf32> to vector<16x64xf32>
    %33 = vector.extract_strided_slice %29 {offsets = [0, 1], sizes = [16, 1], strides = [1, 1]} : vector<16x2xf32> to vector<16x1xf32>
    %34 = vector.shape_cast %33 : vector<16x1xf32> to vector<16x1xf32>
    %35 = vector.broadcast %34 : vector<16x1xf32> to vector<16x64xf32>
    %36 = tpu.concatenate %32, %35 in 1 : vector<16x64xf32>, vector<16x64xf32> -> vector<16x128xf32>
    %c0_13 = arith.constant 0 : index
    %c0_14 = arith.constant 0 : index
    %37 = vector.load %arg1[%c0_13, %c0_14] : memref<16x128xf32, #tpu.memory_space<vmem>>, vector<16x128xf32>
    %38 = arith.mulf %37, %23 : vector<16x128xf32>
    %c0_15 = arith.constant 0 : index
    %c0_16 = arith.constant 0 : index
    %39 = vector.load %arg5[%c0_15, %c0_16] : memref<16x16xf32, #tpu.memory_space<vmem>>, vector<16x16xf32>
    %cst_17 = arith.constant dense<0.000000e+00> : vector<16x128xf32>
    %40 = tpu.matmul %39, %38, %cst_17 {dimension_numbers = #tpu.dot_dimension_numbers<[1], [0], [0], [1], [0, 0, 1, 1], [], []>} : vector<16x16xf32>, vector<16x128xf32>, vector<16x128xf32> -> vector<16x128xf32>
    %41 = arith.mulf %40, %36 : vector<16x128xf32>
    %c0_18 = arith.constant 0 : index
    %c0_19 = arith.constant 0 : index
    %42 = memref.load %arg7[%c0_18, %c0_19] : memref<1x1xf32, #tpu.memory_space<smem>>
    %c0_20 = arith.constant 0 : index
    %c0_21 = arith.constant 0 : index
    %43 = vector.load %arg2[%c0_20, %c0_21] : memref<1x64xf32, #tpu.memory_space<vmem>>, vector<1x64xf32>
    %44 = vector.broadcast %42 : f32 to vector<1x64xf32>
    %45 = arith.mulf %44, %43 : vector<1x64xf32>
    %46 = tpu.concatenate %45, %45 in 1 : vector<1x64xf32>, vector<1x64xf32> -> vector<1x128xf32>
    %47 = vector.broadcast %46 : vector<1x128xf32> to vector<16x128xf32>
    %48 = arith.addf %41, %47 : vector<16x128xf32>
    %cst_22 = arith.constant 2.000000e-01 : f32
    %49 = vector.broadcast %cst_22 : f32 to vector<16x128xf32>
    %50 = arith.mulf %49, %48 : vector<16x128xf32>
    %51 = arith.maximumf %48, %50 : vector<16x128xf32>
    %c0_23 = arith.constant 0 : index
    %c0_24 = arith.constant 0 : index
    %52 = vector.load %arg8[%c0_23, %c0_24] : memref<3x16xf32, #tpu.memory_space<vmem>>, vector<3x16xf32>
    %cst_25 = arith.constant dense<0.000000e+00> : vector<3x128xf32>
    %53 = tpu.matmul %52, %51, %cst_25 {dimension_numbers = #tpu.dot_dimension_numbers<[1], [0], [0], [1], [0, 0, 1, 1], [], []>} : vector<3x16xf32>, vector<16x128xf32>, vector<3x128xf32> -> vector<3x128xf32>
    %c0_26 = arith.constant 0 : index
    %c0_27 = arith.constant 0 : index
    %54 = vector.load %arg9[%c0_26, %c0_27] : memref<3x1xf32, #tpu.memory_space<vmem>>, vector<3x1xf32>
    %55 = vector.broadcast %54 : vector<3x1xf32> to vector<3x128xf32>
    %56 = arith.addf %53, %55 : vector<3x128xf32>
    %c0_28 = arith.constant 0 : index
    %c0_29 = arith.constant 0 : index
    %57 = vector.load %arg10[%c0_28, %c0_29] : memref<3x128xf32, #tpu.memory_space<vmem>>, vector<3x128xf32>
    tpu.vector_store %arg10[%c0_28, %c0_29], %56 {strides = array<i32>} : memref<3x128xf32, #tpu.memory_space<vmem>>, vector<3x128xf32>,
    return
  }
}

</mosaic_0001>

<llo_original>
// kernel: _forward_impl.1
$region0: #{_forward_impl.1}
  #allocation0 [shape = 'u32[]', space=smem, size = 0x4, offset = 0x4, fixed_abs, tag = 'smem constant byte address 0x4 - core index']
  #allocation1 [shape = 'u32[144,128]{1,0:T(1,128)}', space=vmem, size = 0x12000, scoped, tag = 'internal scratch']
  #allocation2 [shape = 'f32[1,1]{1,0:T(1,128)S(6)}', space=smem, size = 0x200, scoped, tag = 'scoped memory for _forward_impl.1']
  %s0 = inlined_call_operand.vmem [shape: f32[2,32], index: 0, kind: input, shape index: {}]
  %s1 = inlined_call_operand.vmem [shape: f32[16,128], index: 1, kind: input, shape index: {}]
  %s2 = inlined_call_operand.vmem [shape: f32[1,64], index: 2, kind: input, shape index: {}]
  %s3 = inlined_call_operand.vmem [shape: f32[16,32], index: 3, kind: input, shape index: {}]
  %s4 = inlined_call_operand.vmem [shape: f32[16,1], index: 4, kind: input, shape index: {}]
  %s5 = inlined_call_operand.vmem [shape: f32[16,16], index: 5, kind: input, shape index: {}]
  %s6 = inlined_call_operand.vmem [shape: f32[16,16], index: 6, kind: input, shape index: {}]
  %s7 = inlined_call_operand.<no memory space> [shape: f32[1,1], index: 7, kind: input, shape index: {}]
  %s8 = inlined_call_operand.vmem [shape: f32[3,16], index: 8, kind: input, shape index: {}]
  %s9 = inlined_call_operand.vmem [shape: f32[3,1], index: 9, kind: input, shape index: {}]
  %s10 = inlined_call_operand.vmem [shape: f32[3,128], index: 10, kind: output, shape index: {}]
  %s11 = sld [smem:[#allocation0]]
  $region50: #{_forward_impl.1} parent=0
    _
  %s13 = ssub.s32 1, %s11
  %s14 = scalar_select 0, %s13, %s11
  %15 = sst [smem:[#allocation2]] %s7
  // Predicated region
  $region2: #{_forward_impl.1} parent=0 // pred_check
    _
  $region3: #{_forward_impl.1} parent=0 // pred_check_branch
    %17 = sbr.rel (0) target = $region5
  $region4: #{_forward_impl.1} parent=0 // pred_region
    _
  $region5: #{_forward_impl.1} parent=0 // pred_fallthru
    _
  // Predicated region
  $region6: #{_forward_impl.1} parent=0 // pred_check
    _
  $region7: #{_forward_impl.1} parent=0 // pred_check_branch
    %19 = sbr.rel (0) target = $region9
  $region8: #{_forward_impl.1} parent=0 // pred_region
    _
  $region9: #{_forward_impl.1} parent=0 // pred_fallthru
    _
  // Predicated region
  $region10: #{_forward_impl.1} parent=0 // pred_check
    _
  $region11: #{_forward_impl.1} parent=0 // pred_check_branch
    %21 = sbr.rel (0) target = $region13
  $region12: #{_forward_impl.1} parent=0 // pred_region
    _
  $region13: #{_forward_impl.1} parent=0 // pred_fallthru
    _
  // Predicated region
  $region14: #{_forward_impl.1} parent=0 // pred_check
    _
  $region15: #{_forward_impl.1} parent=0 // pred_check_branch
    %23 = sbr.rel (0) target = $region17
  $region16: #{_forward_impl.1} parent=0 // pred_region
    _
  $region17: #{_forward_impl.1} parent=0 // pred_fallthru
    _
  // Predicated region
  $region18: #{_forward_impl.1} parent=0 // pred_check
    _
  $region19: #{_forward_impl.1} parent=0 // pred_check_branch
    %25 = sbr.rel (0) target = $region21
  $region20: #{_forward_impl.1} parent=0 // pred_region
    _
  $region21: #{_forward_impl.1} parent=0 // pred_fallthru
    _
  // Predicated region
  $region22: #{_forward_impl.1} parent=0 // pred_check
    _
  $region23: #{_forward_impl.1} parent=0 // pred_check_branch
    %27 = sbr.rel (0) target = $region25
  $region24: #{_forward_impl.1} parent=0 // pred_region
    _
  $region25: #{_forward_impl.1} parent=0 // pred_fallthru
    _
  // Predicated region
  $region26: #{_forward_impl.1} parent=0 // pred_check
    _
  $region27: #{_forward_impl.1} parent=0 // pred_check_branch
    %29 = sbr.rel (0) target = $region29
  $region28: #{_forward_impl.1} parent=0 // pred_region
    _
  $region29: #{_forward_impl.1} parent=0 // pred_fallthru
    _
  // Predicated region
  $region30: #{_forward_impl.1} parent=0 // pred_check
    _
  $region31: #{_forward_impl.1} parent=0 // pred_check_branch
    %31 = sbr.rel (0) target = $region33
  $region32: #{_forward_impl.1} parent=0 // pred_region
    _
  $region33: #{_forward_impl.1} parent=0 // pred_fallthru
    _
  // Predicated region
  $region34: #{_forward_impl.1} parent=0 // pred_check
    _
  $region35: #{_forward_impl.1} parent=0 // pred_check_branch
    %33 = sbr.rel (0) target = $region37
  $region36: #{_forward_impl.1} parent=0 // pred_region
    _
  $region37: #{_forward_impl.1} parent=0 // pred_fallthru
    _
  // Predicated region
  $region38: #{_forward_impl.1} parent=0 // pred_check
    _
  $region39: #{_forward_impl.1} parent=0 // pred_check_branch
    %35 = sbr.rel (0) target = $region41
  $region40: #{_forward_impl.1} parent=0 // pred_region
    _
  $region41: #{_forward_impl.1} parent=0 // pred_fallthru
    _
  %v36 = vld [vmem:[%s3] sm:$0xff]
  %v37 = vld [vmem:[%s3 + $0x8] sm:$0xff]
  %v38 = vld [vmem:[%s4] sm:$0xff]
  %v39 = vld [vmem:[%s4 + $0x8] sm:$0xff]
  %v40 = vld [vmem:[%s0] sm:$0x1]
  %v41 = vlaneseq
  %v42 = vshrl.u32 %v41, 7
  %v43 = vsub.s32 0, %v42
  %v44 = vrot.slane %v40, %v43
  %v45 = vmul.f32 %v36, %v44
  %v46 = vmul.f32 %v37, %v44
  %vm47 = vcmask 261120
  %v48 = vsel %vm47, %v45, 0.0
  %49 = vadd.xlane.f32.xlu0 %v48
  %v50 = vpop.xlane.xlu0 %49
  %v51 = vsel %vm47, %v46, 0.0
  %52 = vadd.xlane.f32.xlu0 %v51
  %v53 = vpop.xlane.xlu0 %52
  %v54 = vadd.f32 %v50, %v38
  %v55 = vadd.f32 %v53, %v39
  %v56 = vadd.f32 %v54, 1.0
  %v57 = vadd.f32 %v55, 1.0
  %v58 = vld [vmem:[%s0 + $0x1] sm:$0x1]
  %v59 = vlaneseq
  %v60 = vshrl.u32 %v59, 7
  %v61 = vsub.s32 0, %v60
  %v62 = vrot.slane %v58, %v61
  %v63 = vmul.f32 %v36, %v62
  %v64 = vmul.f32 %v37, %v62
  %v65 = vsel %vm47, %v63, 0.0
  %66 = vadd.xlane.f32.xlu0 %v65
  %v67 = vpop.xlane.xlu0 %66
  %v68 = vsel %vm47, %v64, 0.0
  %69 = vadd.xlane.f32.xlu0 %v68
  %v70 = vpop.xlane.xlu0 %69
  %v71 = vadd.f32 %v67, %v38
  %v72 = vadd.f32 %v70, %v39
  %v73 = vadd.f32 %v71, 1.0
  %v74 = vadd.f32 %v72, 1.0
  %77 = vrot.lane.b32.xlu0 %v73, 1
  %v78 = vpop.permute.xlu0 %77
  %79 = vrot.lane.b32.xlu0 %v74, 1
  %v80 = vpop.permute.xlu0 %79
  %vm83 = vcmask 7168
  %v84 = vsel %vm83, %v56, %v78
  %v85 = vsel %vm83, %v57, %v80
  %87 = vset.pattern.permute.xlu0 0
  %88 = vperm.xlu0 %87, %v56
  %v89 = vpop.permute.xlu0 %88
  %92 = vset.pattern.permute.xlu0 0
  %93 = vperm.xlu0 %92, %v57
  %v94 = vpop.permute.xlu0 %93
  %96 = vset.pattern.permute.xlu0 0
  %97 = vperm.xlu0 %96, %v73
  %v98 = vpop.permute.xlu0 %97
  %100 = vset.pattern.permute.xlu0 0
  %101 = vperm.xlu0 %100, %v74
  %v102 = vpop.permute.xlu0 %101
  %vm104 = vcmask 523264
  %v105 = vsel %vm104, %v89, %v98
  %v106 = vsel %vm104, %v94, %v102
  %v107 = vld [vmem:[%s6] sm:$0xff]
  %v108 = vld [vmem:[%s6 + $0x8] sm:$0xff]
  %v109 = vmul.f32 %v84, %v84
  %v110 = vmul.f32 %v85, %v85
  %vm111 = vcmask 130048
  %v113 = vsel %vm111, %v107, 0
  %v116 = vsel %vm111, %v108, 0
  %118 = vmatprep.subr.mxu0 0.0
  %119 = vmatpush1.msra.mxu0 0.0
  %120 = vmatprep.subr.mxu0 0.0
  %121 = vmatpush1.msra.mxu0 0.0
  %122 = vmatprep.subr.mxu0 0.0
  %123 = vmatpush1.msra.mxu0 0.0
  %124 = vmatprep.subr.mxu0 0.0
  %125 = vmatpush1.msra.mxu0 0.0
  %126 = vmatprep.subr.mxu0 0.0
  %127 = vmatpush1.msra.mxu0 0.0
  %128 = vmatprep.subr.mxu0 0.0
  %129 = vmatpush1.msra.mxu0 0.0
  %130 = vmatprep.subr.mxu0 0.0
  %131 = vmatpush1.msra.mxu0 0.0
  %132 = vmatprep.subr.mxu0 0.0
  %133 = vmatpush1.msra.mxu0 0.0
  %134 = vmatprep.subr.mxu0 0.0
  %135 = vmatpush1.msra.mxu0 0.0
  %136 = vmatprep.subr.mxu0 0.0
  %137 = vmatpush1.msra.mxu0 0.0
  %138 = vmatprep.subr.mxu0 0.0
  %139 = vmatpush1.msra.mxu0 0.0
  %140 = vmatprep.subr.mxu0 0.0
  %141 = vmatpush1.msra.mxu0 0.0
  %142 = vmatprep.subr.mxu0 0.0
  %143 = vmatpush1.msra.mxu0 0.0
  %144 = vmatprep.subr.mxu0 0.0
  %145 = vmatpush1.msra.mxu0 0.0
  %146 = vmatprep.subr.mxu0 0.0
  %147 = vmatpush1.msra.mxu0 %v110
  %148 = vmatprep.subr.mxu0 0.0
  %149 = vmatpush1.msra.mxu0 %v109
  %150 = vmatprep.subr.mxu0 0.0
  %151 = vmatpush2.msra.mxu0 0.0
  %152 = vmatprep.subr.mxu0 0.0
  %153 = vmatpush2.msra.mxu0 0.0
  %154 = vmatprep.subr.mxu0 0.0
  %155 = vmatpush2.msra.mxu0 0.0
  %156 = vmatprep.subr.mxu0 0.0
  %157 = vmatpush2.msra.mxu0 0.0
  %158 = vmatprep.subr.mxu0 0.0
  %159 = vmatpush2.msra.mxu0 0.0
  %160 = vmatprep.subr.mxu0 0.0
  %161 = vmatpush2.msra.mxu0 0.0
  %162 = vmatprep.subr.mxu0 0.0
  %163 = vmatpush2.msra.mxu0 0.0
  %164 = vmatprep.subr.mxu0 0.0
  %165 = vmatpush2.msra.mxu0 0.0
  %166 = vmatprep.subr.mxu0 0.0
  %167 = vmatpush2.msra.mxu0 0.0
  %168 = vmatprep.subr.mxu0 0.0
  %169 = vmatpush2.msra.mxu0 0.0
  %170 = vmatprep.subr.mxu0 0.0
  %171 = vmatpush2.msra.mxu0 0.0
  %172 = vmatprep.subr.mxu0 0.0
  %173 = vmatpush2.msra.mxu0 0.0
  %174 = vmatprep.subr.mxu0 0.0
  %175 = vmatpush2.msra.mxu0 0.0
  %176 = vmatprep.subr.mxu0 0.0
  %177 = vmatpush2.msra.mxu0 0.0
  %178 = vmatprep.subr.mxu0 0.0
  %179 = vmatpush2.msra.mxu0 0.0
  %180 = vmatprep.subr.mxu0 0.0
  %181 = vmatpush2.msra.mxu0 0.0
  %182 = vmatprep.mubr.f32.mxu0 0.0
  %183 = vmatmul.mubr.f32.gmra.mxu0 %v113
  %v184 = vpop.f32.mrf.mxu0
  %v185 = vadd.f32 1e-08, %v184
  %v186 = vpop.f32.mrf.mxu0
  %187 = vmatprep.mubr.f32.mxu0 0.0
  %188 = vmatmul.mubr.f32.gmra.mxu0 %v116
  %v189 = vpop.f32.mrf.mxu0
  %v190 = vadd.f32 1e-08, %v189
  %v191 = vpop.f32.mrf.mxu0
  %192 = vdwg.mxu0
  %v193 = vrsqrt.pop %v185
  %v194 = vrsqrt.pop %v190
  %196 = vset.pattern.permute.xlu0 0
  %197 = vperm.xlu0 %196, %v193
  %v198 = vpop.permute.xlu0 %197
  %201 = vset.pattern.permute.xlu0 0
  %202 = vperm.xlu0 %201, %v194
  %v203 = vpop.permute.xlu0 %202
  %205 = vset.pattern.permute.xlu0 1
  %206 = vperm.xlu0 %205, %v193
  %v207 = vpop.permute.xlu0 %206
  %209 = vset.pattern.permute.xlu0 1
  %210 = vperm.xlu0 %209, %v194
  %v211 = vpop.permute.xlu0 %210
  %v213 = vsel %vm104, %v198, %v207
  %v214 = vsel %vm104, %v203, %v211
  %v215 = vld [vmem:[%s1] sm:$0xff]
  %v216 = vld [vmem:[%s1 + $0x8] sm:$0xff]
  %v217 = vmul.f32 %v215, %v105
  %v218 = vmul.f32 %v216, %v106
  %v219 = vld [vmem:[%s5] sm:$0xff]
  %v220 = vld [vmem:[%s5 + $0x8] sm:$0xff]
  %v222 = vsel %vm111, %v219, 0
  %v225 = vsel %vm111, %v220, 0
  %227 = vmatprep.subr.mxu0 0.0
  %228 = vmatpush1.msra.mxu0 0.0
  %229 = vmatprep.subr.mxu0 0.0
  %230 = vmatpush1.msra.mxu0 0.0
  %231 = vmatprep.subr.mxu0 0.0
  %232 = vmatpush1.msra.mxu0 0.0
  %233 = vmatprep.subr.mxu0 0.0
  %234 = vmatpush1.msra.mxu0 0.0
  %235 = vmatprep.subr.mxu0 0.0
  %236 = vmatpush1.msra.mxu0 0.0
  %237 = vmatprep.subr.mxu0 0.0
  %238 = vmatpush1.msra.mxu0 0.0
  %239 = vmatprep.subr.mxu0 0.0
  %240 = vmatpush1.msra.mxu0 0.0
  %241 = vmatprep.subr.mxu0 0.0
  %242 = vmatpush1.msra.mxu0 0.0
  %243 = vmatprep.subr.mxu0 0.0
  %244 = vmatpush1.msra.mxu0 0.0
  %245 = vmatprep.subr.mxu0 0.0
  %246 = vmatpush1.msra.mxu0 0.0
  %247 = vmatprep.subr.mxu0 0.0
  %248 = vmatpush1.msra.mxu0 0.0
  %249 = vmatprep.subr.mxu0 0.0
  %250 = vmatpush1.msra.mxu0 0.0
  %251 = vmatprep.subr.mxu0 0.0
  %252 = vmatpush1.msra.mxu0 0.0
  %253 = vmatprep.subr.mxu0 0.0
  %254 = vmatpush1.msra.mxu0 0.0
  %255 = vmatprep.subr.mxu0 0.0
  %256 = vmatpush1.msra.mxu0 %v218
  %257 = vmatprep.subr.mxu0 0.0
  %258 = vmatpush1.msra.mxu0 %v217
  %259 = vmatprep.subr.mxu0 0.0
  %260 = vmatpush2.msra.mxu0 0.0
  %261 = vmatprep.subr.mxu0 0.0
  %262 = vmatpush2.msra.mxu0 0.0
  %263 = vmatprep.subr.mxu0 0.0
  %264 = vmatpush2.msra.mxu0 0.0
  %265 = vmatprep.subr.mxu0 0.0
  %266 = vmatpush2.msra.mxu0 0.0
  %267 = vmatprep.subr.mxu0 0.0
  %268 = vmatpush2.msra.mxu0 0.0
  %269 = vmatprep.subr.mxu0 0.0
  %270 = vmatpush2.msra.mxu0 0.0
  %271 = vmatprep.subr.mxu0 0.0
  %272 = vmatpush2.msra.mxu0 0.0
  %273 = vmatprep.subr.mxu0 0.0
  %274 = vmatpush2.msra.mxu0 0.0
  %275 = vmatprep.subr.mxu0 0.0
  %276 = vmatpush2.msra.mxu0 0.0
  %277 = vmatprep.subr.mxu0 0.0
  %278 = vmatpush2.msra.mxu0 0.0
  %279 = vmatprep.subr.mxu0 0.0
  %280 = vmatpush2.msra.mxu0 0.0
  %281 = vmatprep.subr.mxu0 0.0
  %282 = vmatpush2.msra.mxu0 0.0
  %283 = vmatprep.subr.mxu0 0.0
  %284 = vmatpush2.msra.mxu0 0.0
  %285 = vmatprep.subr.mxu0 0.0
  %286 = vmatpush2.msra.mxu0 0.0
  %287 = vmatprep.subr.mxu0 0.0
  %288 = vmatpush2.msra.mxu0 0.0
  %289 = vmatprep.subr.mxu0 0.0
  %290 = vmatpush2.msra.mxu0 0.0
  %291 = vmatprep.mubr.f32.mxu0 0.0
  %292 = vmatmul.mubr.f32.gmra.mxu0 %v222
  %v293 = vpop.f32.mrf.mxu0
  %v294 = vadd.f32 0.0, %v293
  %v295 = vpop.f32.mrf.mxu0
  %296 = vmatprep.mubr.f32.mxu0 0.0
  %297 = vmatmul.mubr.f32.gmra.mxu0 %v225
  %v298 = vpop.f32.mrf.mxu0
  %v299 = vadd.f32 0.0, %v298
  %v300 = vpop.f32.mrf.mxu0
  %301 = vdwg.mxu0
  %v302 = vmul.f32 %v294, %v213
  %v303 = vmul.f32 %v299, %v214
  %s304 = sld [smem:[#allocation2]]
  %v305 = vld [vmem:[%s2] sm:$0x1]
  %v306 = vstv %s304
  %v307 = vmul.f32 %v306, %v305
  %v309 = vlaneseq
  %v310 = vshrl.u32 %v309, 7
  %v311 = vsub.s32 0, %v310
  %v312 = vrot.slane %v307, %v311
  %313 = vrot.lane.b32.xlu0 %v312, 64
  %v314 = vpop.permute.xlu0 %313
  %v316 = vsel %vm104, %v307, %v314
  %v317 = vlaneseq
  %v318 = vshrl.u32 %v317, 7
  %v319 = vsub.s32 0, %v318
  %v320 = vrot.slane %v316, %v319
  %v321 = vadd.f32 %v302, %v320
  %v322 = vadd.f32 %v303, %v320
  %v323 = vmul.f32 %v321, 0.2
  %v324 = vmul.f32 %v322, 0.2
  %v325 = vmax.f32 %v321, %v323
  %v326 = vmax.f32 %v322, %v324
  %v327 = vld [vmem:[%s8] sm:$0x7]
  %v328 = vld [vmem:[%s9] sm:$0x7]
  %330 = vset.pattern.permute.xlu0 0
  %331 = vperm.xlu0 %330, %v328
  %v332 = vpop.permute.xlu0 %331
  %v335 = vsel %vm111, %v327, 0
  %337 = vmatprep.subr.mxu0 0.0
  %338 = vmatpush1.msra.mxu0 0.0
  %339 = vmatprep.subr.mxu0 0.0
  %340 = vmatpush1.msra.mxu0 0.0
  %341 = vmatprep.subr.mxu0 0.0
  %342 = vmatpush1.msra.mxu0 0.0
  %343 = vmatprep.subr.mxu0 0.0
  %344 = vmatpush1.msra.mxu0 0.0
  %345 = vmatprep.subr.mxu0 0.0
  %346 = vmatpush1.msra.mxu0 0.0
  %347 = vmatprep.subr.mxu0 0.0
  %348 = vmatpush1.msra.mxu0 0.0
  %349 = vmatprep.subr.mxu0 0.0
  %350 = vmatpush1.msra.mxu0 0.0
  %351 = vmatprep.subr.mxu0 0.0
  %352 = vmatpush1.msra.mxu0 0.0
  %353 = vmatprep.subr.mxu0 0.0
  %354 = vmatpush1.msra.mxu0 0.0
  %355 = vmatprep.subr.mxu0 0.0
  %356 = vmatpush1.msra.mxu0 0.0
  %357 = vmatprep.subr.mxu0 0.0
  %358 = vmatpush1.msra.mxu0 0.0
  %359 = vmatprep.subr.mxu0 0.0
  %360 = vmatpush1.msra.mxu0 0.0
  %361 = vmatprep.subr.mxu0 0.0
  %362 = vmatpush1.msra.mxu0 0.0
  %363 = vmatprep.subr.mxu0 0.0
  %364 = vmatpush1.msra.mxu0 0.0
  %365 = vmatprep.subr.mxu0 0.0
  %366 = vmatpush1.msra.mxu0 %v326
  %367 = vmatprep.subr.mxu0 0.0
  %368 = vmatpush1.msra.mxu0 %v325
  %369 = vmatprep.subr.mxu0 0.0
  %370 = vmatpush2.msra.mxu0 0.0
  %371 = vmatprep.subr.mxu0 0.0
  %372 = vmatpush2.msra.mxu0 0.0
  %373 = vmatprep.subr.mxu0 0.0
  %374 = vmatpush2.msra.mxu0 0.0
  %375 = vmatprep.subr.mxu0 0.0
  %376 = vmatpush2.msra.mxu0 0.0
  %377 = vmatprep.subr.mxu0 0.0
  %378 = vmatpush2.msra.mxu0 0.0
  %379 = vmatprep.subr.mxu0 0.0
  %380 = vmatpush2.msra.mxu0 0.0
  %381 = vmatprep.subr.mxu0 0.0
  %382 = vmatpush2.msra.mxu0 0.0
  %383 = vmatprep.subr.mxu0 0.0
  %384 = vmatpush2.msra.mxu0 0.0
  %385 = vmatprep.subr.mxu0 0.0
  %386 = vmatpush2.msra.mxu0 0.0
  %387 = vmatprep.subr.mxu0 0.0
  %388 = vmatpush2.msra.mxu0 0.0
  %389 = vmatprep.subr.mxu0 0.0
  %390 = vmatpush2.msra.mxu0 0.0
  %391 = vmatprep.subr.mxu0 0.0
  %392 = vmatpush2.msra.mxu0 0.0
  %393 = vmatprep.subr.mxu0 0.0
  %394 = vmatpush2.msra.mxu0 0.0
  %395 = vmatprep.subr.mxu0 0.0
  %396 = vmatpush2.msra.mxu0 0.0
  %397 = vmatprep.subr.mxu0 0.0
  %398 = vmatpush2.msra.mxu0 0.0
  %399 = vmatprep.subr.mxu0 0.0
  %400 = vmatpush2.msra.mxu0 0.0
  %401 = vmatprep.mubr.f32.mxu0 0.0
  %402 = vmatmul.mubr.f32.gmra.mxu0 %v335
  %v403 = vpop.f32.mrf.mxu0
  %v404 = vadd.f32 %v332, %v403
  %v405 = vpop.f32.mrf.mxu0
  %406 = vdwg.mxu0
  %407 = vst [vmem:[%s10] sm:$0x7] %v404
  // Predicated region
  $region42: #{_forward_impl.1} parent=0 // pred_check
    _
  $region43: #{_forward_impl.1} parent=0 // pred_check_branch
    %409 = sbr.rel (0) target = $region45
  $region44: #{_forward_impl.1} parent=0 // pred_region
    _
  $region45: #{_forward_impl.1} parent=0 // pred_fallthru
    _
  // Predicated region
  $region46: #{_forward_impl.1} parent=0 // pred_check
    _
  $region47: #{_forward_impl.1} parent=0 // pred_check_branch
    %411 = sbr.rel (0) target = $region49
  $region48: #{_forward_impl.1} parent=0 // pred_region
    _
  $region49: #{_forward_impl.1} parent=0 // pred_fallthru
    _

</llo_original>
